<compile_context>
chip_gen: v7x
topology: tpu7x:2x2x1
jax: 0.10.0
libtpu: 0.0.40
codegen_flags: <defaults>
</compile_context>

<pallas_src>
import functools

import jax
import jax.numpy as jnp
from jax.experimental import pallas as pl
from jax.experimental.pallas import tpu as pltpu

LANE = 128
SUBLANE = 8


def _round_up(n: int, m: int) -> int:
    return (n + m - 1) // m * m


# -------------------- fused normalize + Linear head kernel --------------------

def _obs_norm_linear_kernel(x_ref, mean_ref, inv_std_ref, w_ref, b_ref, o_ref,
                            *, low, high, dot_dtype):
    # Normalize + clamp in f32 on the VMEM tile (free: hides under MXU/DMA).
    xn = (x_ref[...].astype(jnp.float32) - mean_ref[...]) * inv_std_ref[...]
    if low is not None:
        xn = jnp.maximum(xn, jnp.asarray(low, jnp.float32))
    if high is not None:
        xn = jnp.minimum(xn, jnp.asarray(high, jnp.float32))
    acc = jnp.dot(xn.astype(dot_dtype), w_ref[...],
                  preferred_element_type=jnp.float32)
    o_ref[...] = (acc + b_ref[...]).astype(o_ref.dtype)


def pallas_obs_norm_linear(x2d, mean_row, inv_std_row, w_pad, b_pad, n_out,
                           *, low=None, high=None, dot_dtype=None,
                           block_bytes: int = 2 << 20):
    """clamp((x - mean) * inv_std, low, high) @ w_pad + b_pad, sliced to n_out."""
    B, K = x2d.shape
    K_w, N_pad = w_pad.shape
    assert K_w == K
    if dot_dtype is None:
        dot_dtype = w_pad.dtype

    # Byte-budgeted row tile (bounded by the wider of the x and output blocks).
    itemsize = x2d.dtype.itemsize
    widest = max(K, N_pad) * itemsize
    tb = max(SUBLANE, (block_bytes // widest) // SUBLANE * SUBLANE)
    tb = min(tb, _round_up(B, SUBLANE))
    grid = (pl.cdiv(B, tb),)

    out = pl.pallas_call(
        functools.partial(_obs_norm_linear_kernel,
                          low=low, high=high, dot_dtype=dot_dtype),
        out_shape=jax.ShapeDtypeStruct((B, N_pad), x2d.dtype),
        grid_spec=pltpu.PrefetchScalarGridSpec(
            num_scalar_prefetch=0,
            grid=grid,
            in_specs=[
                pl.BlockSpec((tb, K), lambda i: (i, 0)),       # x rows
                pl.BlockSpec((1, K), lambda i: (0, 0)),        # mean (f32)
                pl.BlockSpec((1, K), lambda i: (0, 0)),        # 1/std (f32)
                pl.BlockSpec((K, N_pad), lambda i: (0, 0)),    # padded weights
                pl.BlockSpec((1, N_pad), lambda i: (0, 0)),    # padded bias (f32)
            ],
            out_specs=pl.BlockSpec((tb, N_pad), lambda i: (i, 0)),
        ),
        compiler_params=pltpu.CompilerParams(
            # batch axis shards across v7x's 2 TensorCores; for a LARGE head,
            # TODO(synk): also split N across cores so each holds half of w.
            dimension_semantics=("parallel",),
            vmem_limit_bytes=32 << 20,
        ),
    )(x2d, mean_row, inv_std_row, w_pad, b_pad)
    return out[:, :n_out]


# ---------------- standalone normalizer (for non-fusable wrapped modules) -----

def _obs_norm_kernel(x_ref, mean_ref, inv_std_ref, o_ref, *, low, high):
    y = (x_ref[...].astype(jnp.float32) - mean_ref[...]) * inv_std_ref[...]
    if low is not None:
        y = jnp.maximum(y, jnp.asarray(low, jnp.float32))
    if high is not None:
        y = jnp.minimum(y, jnp.asarray(high, jnp.float32))
    o_ref[...] = y.astype(o_ref.dtype)


def _choose_row_packing(n_rows: int, feat: int, itemsize: int,
                        max_row_bytes: int) -> int:
    """Largest k with k | n_rows, (k*feat) % 128 == 0, k*feat*itemsize <= max_row_bytes."""
    best = 1
    max_k = max(1, max_row_bytes // max(feat * itemsize, 1))
    for k in range(1, min(n_rows, max_k) + 1):
        if n_rows % k == 0 and (k * feat) % LANE == 0:
            best = k
    return best


def pallas_obs_norm(x, mean, stdev, low=None, high=None,
                    target_block_bytes: int = 4 << 20):
    """y = clamp((x - mean) / stdev, low, high); lane-dense, no pads."""
    orig_shape = x.shape
    D = int(orig_shape[-1])
    B = x.size // D
    x2d = x.reshape(B, D)                           # free contiguous reshape
    itemsize = x.dtype.itemsize

    # Row packing bounded by block bytes (not a lane cap), so awkward D still
    # gets a multiple-of-128 last dim whenever it divides the row count.
    k = _choose_row_packing(B, D, itemsize, target_block_bytes // SUBLANE)
    W, R = k * D, B // k
    xw = x2d.reshape(R, W)

    inv_std = 1.0 / stdev.astype(jnp.float32)
    mean_row = jnp.tile(mean.astype(jnp.float32).reshape(1, D), (1, k))
    inv_std_row = jnp.tile(inv_std.reshape(1, D), (1, k))

    rows = max(SUBLANE,
               (target_block_bytes // (W * itemsize)) // SUBLANE * SUBLANE)
    tile_rows = R if R <= rows else rows
    grid = (pl.cdiv(R, tile_rows),)

    out = pl.pallas_call(
        functools.partial(_obs_norm_kernel, low=low, high=high),
        out_shape=jax.ShapeDtypeStruct((R, W), x.dtype),
        grid_spec=pltpu.PrefetchScalarGridSpec(
            num_scalar_prefetch=0,
            grid=grid,
            in_specs=[
                pl.BlockSpec((tile_rows, W), lambda i: (i, 0)),
                pl.BlockSpec((1, W), lambda i: (0, 0)),
                pl.BlockSpec((1, W), lambda i: (0, 0)),
            ],
            out_specs=pl.BlockSpec((tile_rows, W), lambda i: (i, 0)),
        ),
        compiler_params=pltpu.CompilerParams(
            dimension_semantics=("parallel",),
            vmem_limit_bytes=32 << 20,
        ),
    )(xw, mean_row, inv_std_row)
    return out.reshape(orig_shape)


# ------------------------------ wrapper module --------------------------------

class ObsNormWrapperModule:
    """Pallas port of evotorch's ObsNormWrapperModule forward pass."""

    def __init__(self, mean, stdev, w, b, low=None, high=None,
                 use_bf16_matmul: bool = False):
        self.low = low
        self.high = high
        self.mean = mean
        self.stdev = stdev
        K, n_out = int(w.shape[0]), int(w.shape[1])
        self.obs_dim, self.n_out = K, n_out

        # Precomputed once (perf feedback): normalizer rows in f32.
        self.mean_row = mean.astype(jnp.float32).reshape(1, K)
        self.inv_std_row = (1.0 / stdev.astype(jnp.float32)).reshape(1, K)

        # Lane-dense output: pad N up to a multiple of 128 once at init.
        # (Zero rows/cols contribute nothing to the dot.)
        n_pad = max(LANE, _round_up(n_out, LANE))
        self.dot_dtype = jnp.bfloat16 if use_bf16_matmul else w.dtype
        w_pad = jnp.zeros((K, n_pad), w.dtype).at[:, :n_out].set(w)
        self.w_pad = w_pad.astype(self.dot_dtype)
        self.b_pad = jnp.zeros((1, n_pad), jnp.float32).at[:, :n_out].set(
            b.astype(jnp.float32))

    def _wrapped_module(self, x2d, h=None):
        # Stand-in for the arbitrary wrapped nn.Module: a Linear policy head,
        # fused with the normalizer (normalize + clamp happen inside the kernel).
        y = pallas_obs_norm_linear(
            x2d, self.mean_row, self.inv_std_row, self.w_pad, self.b_pad,
            self.n_out, low=self.low, high=self.high, dot_dtype=self.dot_dtype)
        if h is None:
            return y
        return y, h   # mirrors wrapped modules that return (output, hidden)

    def __call__(self, x, h=None):
        lead = x.shape[:-1]
        x2d = x.reshape(-1, self.obs_dim)
        # Normalizer is fused into the wrapped Linear head (no separate launch,
        # no HBM round-trip of the normalized activations).
        if h is None:
            result = self._wrapped_module(x2d)
        else:
            result = self._wrapped_module(x2d, h)
        if isinstance(result, tuple):
            y, h_out = result
            return y.reshape(*lead, self.n_out), h_out
        return result.reshape(*lead, self.n_out)


# ----------------------------------- demo ------------------------------------

if __name__ == "__main__":
    key = jax.random.PRNGKey(0)
    kx, km, ks, kw, kb, kh = jax.random.split(key, 6)

    batch, obs_dim, act_dim = 8, 32, 16
    x = jax.random.normal(kx, (batch, obs_dim), dtype=jnp.float32) * 2.0 + 0.5
    mean = jax.random.normal(km, (obs_dim,), dtype=jnp.float32) * 0.3
    stdev = jax.random.uniform(ks, (obs_dim,), dtype=jnp.float32,
                               minval=0.5, maxval=2.0)
    w = jax.random.normal(kw, (obs_dim, act_dim), dtype=jnp.float32) * 0.1
    b = jax.random.normal(kb, (act_dim,), dtype=jnp.float32) * 0.1
    low, high = -3.0, 3.0

    # Pure-JAX reference (same semantics as the torch module).
    xn_ref = jnp.clip((x - mean[None, :]) / stdev[None, :], low, high)
    y_ref = xn_ref @ w + b[None, :]

    module = ObsNormWrapperModule(mean, stdev, w, b, low=low, high=high)

    # Path 1: h is None -> plain tensor (fused normalize + Linear kernel).
    y = jax.block_until_ready(module(x))

    # Path 2: with hidden state -> (tensor, h).
    h0 = jax.random.normal(kh, (batch, act_dim), dtype=jnp.float32)
    y2, h2 = module(x, h0)
    jax.block_until_ready(y2)

    assert y.shape == (batch, act_dim) and y.dtype == x.dtype
    assert jnp.allclose(y, y_ref, atol=1e-5, rtol=1e-5), "h=None path mismatch"
    assert jnp.allclose(y2, y_ref, atol=1e-5, rtol=1e-5), "h path mismatch"
    assert jnp.allclose(h2, h0), "hidden state must pass through unchanged"

    # Standalone normalizer kernel (kept for non-fusable wrapped modules).
    xn = jax.block_until_ready(pallas_obs_norm(x, mean, stdev, low, high))
    assert jnp.allclose(xn, xn_ref, atol=1e-5, rtol=1e-5), "normalizer mismatch"

    # Optional bf16 MXU path (f32 accumulation) — looser tolerance by design.
    module_bf16 = ObsNormWrapperModule(mean, stdev, w, b, low=low, high=high,
                                       use_bf16_matmul=True)
    y_bf16 = jax.block_until_ready(module_bf16(x))
    assert jnp.allclose(y_bf16, y_ref, atol=2e-1, rtol=1e-1), "bf16 path mismatch"

    print("KERNEL_OK")
</pallas_src>

<mosaic_0001>
module attributes {stable_mosaic.version = 11 : i64} {
  func.func @_obs_norm_linear_kernel(%arg0: i32, %arg1: memref<8x32xf32, #tpu.memory_space<vmem>>, %arg2: memref<1x32xf32, #tpu.memory_space<vmem>>, %arg3: memref<1x32xf32, #tpu.memory_space<vmem>>, %arg4: memref<32x128xf32, #tpu.memory_space<vmem>>, %arg5: memref<1x128xf32, #tpu.memory_space<vmem>>, %arg6: memref<8x128xf32, #tpu.memory_space<vmem>>) attributes {dimension_semantics = [#tpu.dimension_semantics<parallel>], iteration_bounds = array<i64: 1>, scalar_prefetch = 0 : i64, scratch_operands = 0 : i64, tpu.core_type = #tpu.core_type<tc>, window_params = [{transform_indices = @transform_0, window_bounds = array<i64: 8, 32>}, {pipeline_mode = #tpu.pipeline_mode<synchronous>, transform_indices = @transform_1, window_bounds = array<i64: 1, 32>}, {pipeline_mode = #tpu.pipeline_mode<synchronous>, transform_indices = @transform_2, window_bounds = array<i64: 1, 32>}, {pipeline_mode = #tpu.pipeline_mode<synchronous>, transform_indices = @transform_3, window_bounds = array<i64: 32, 128>}, {pipeline_mode = #tpu.pipeline_mode<synchronous>, transform_indices = @transform_4, window_bounds = array<i64: 1, 128>}, {transform_indices = @transform_5, window_bounds = array<i64: 8, 128>}]} {
    %c0 = arith.constant 0 : index
    %c0_0 = arith.constant 0 : index
    %0 = vector.load %arg1[%c0, %c0_0] : memref<8x32xf32, #tpu.memory_space<vmem>>, vector<8x32xf32>
    %c0_1 = arith.constant 0 : index
    %c0_2 = arith.constant 0 : index
    %1 = vector.load %arg2[%c0_1, %c0_2] : memref<1x32xf32, #tpu.memory_space<vmem>>, vector<1x32xf32>
    %2 = vector.broadcast %1 : vector<1x32xf32> to vector<8x32xf32>
    %3 = arith.subf %0, %2 : vector<8x32xf32>
    %c0_3 = arith.constant 0 : index
    %c0_4 = arith.constant 0 : index
    %4 = vector.load %arg3[%c0_3, %c0_4] : memref<1x32xf32, #tpu.memory_space<vmem>>, vector<1x32xf32>
    %5 = vector.broadcast %4 : vector<1x32xf32> to vector<8x32xf32>
    %6 = arith.mulf %3, %5 : vector<8x32xf32>
    %cst = arith.constant -3.000000e+00 : f32
    %7 = vector.broadcast %cst : f32 to vector<8x32xf32>
    %8 = arith.maximumf %6, %7 : vector<8x32xf32>
    %cst_5 = arith.constant 3.000000e+00 : f32
    %9 = vector.broadcast %cst_5 : f32 to vector<8x32xf32>
    %10 = arith.minimumf %8, %9 : vector<8x32xf32>
    %c0_6 = arith.constant 0 : index
    %c0_7 = arith.constant 0 : index
    %11 = vector.load %arg4[%c0_6, %c0_7] : memref<32x128xf32, #tpu.memory_space<vmem>>, vector<32x128xf32>
    %cst_8 = arith.constant dense<0.000000e+00> : vector<8x128xf32>
    %12 = tpu.matmul %10, %11, %cst_8 {dimension_numbers = #tpu.dot_dimension_numbers<[1], [0], [0], [1], [0, 0, 1, 1], [], []>} : vector<8x32xf32>, vector<32x128xf32>, vector<8x128xf32> -> vector<8x128xf32>
    %c0_9 = arith.constant 0 : index
    %c0_10 = arith.constant 0 : index
    %13 = vector.load %arg5[%c0_9, %c0_10] : memref<1x128xf32, #tpu.memory_space<vmem>>, vector<1x128xf32>
    %14 = vector.broadcast %13 : vector<1x128xf32> to vector<8x128xf32>
    %15 = arith.addf %12, %14 : vector<8x128xf32>
    %c0_11 = arith.constant 0 : index
    %c0_12 = arith.constant 0 : index
    %16 = vector.load %arg6[%c0_11, %c0_12] : memref<8x128xf32, #tpu.memory_space<vmem>>, vector<8x128xf32>
    tpu.vector_store %arg6[%c0_11, %c0_12], %15 {strides = array<i32>} : memref<8x128xf32, #tpu.memory_space<vmem>>, vector<8x128xf32>,
    return
  }
  func.func @transform_0(%arg0: i32) -> (i32, i32) {
    %c0_i32 = arith.constant 0 : i32
    %c0_i32_0 = arith.constant 0 : i32
    return %arg0, %c0_i32 : i32, i32
  }
  func.func @transform_1(%arg0: i32) -> (i32, i32) {
    %c0_i32 = arith.constant 0 : i32
    %c0_i32_0 = arith.constant 0 : i32
    %c0_i32_1 = arith.constant 0 : i32
    return %c0_i32, %c0_i32_0 : i32, i32
  }
  func.func @transform_2(%arg0: i32) -> (i32, i32) {
    %c0_i32 = arith.constant 0 : i32
    %c0_i32_0 = arith.constant 0 : i32
    %c0_i32_1 = arith.constant 0 : i32
    return %c0_i32, %c0_i32_0 : i32, i32
  }
  func.func @transform_3(%arg0: i32) -> (i32, i32) {
    %c0_i32 = arith.constant 0 : i32
    %c0_i32_0 = arith.constant 0 : i32
    %c0_i32_1 = arith.constant 0 : i32
    return %c0_i32, %c0_i32_0 : i32, i32
  }
  func.func @transform_4(%arg0: i32) -> (i32, i32) {
    %c0_i32 = arith.constant 0 : i32
    %c0_i32_0 = arith.constant 0 : i32
    %c0_i32_1 = arith.constant 0 : i32
    return %c0_i32, %c0_i32_0 : i32, i32
  }
  func.func @transform_5(%arg0: i32) -> (i32, i32) {
    %c0_i32 = arith.constant 0 : i32
    %c0_i32_0 = arith.constant 0 : i32
    return %arg0, %c0_i32 : i32, i32
  }
}

</mosaic_0001>

<llo_original>
// kernel: tpu_custom_call.1
$region0: #{tpu_custom_call.1}
  #allocation0 [shape = 'u32[]', space=smem, size = 0x4, offset = 0x4, fixed_abs, tag = 'smem constant byte address 0x4 - core index']
  #allocation1 [shape = 'u32[144,128]{1,0:T(1,128)}', space=vmem, size = 0x12000, scoped, tag = 'internal scratch']
  %s0 = inlined_call_operand.hbm [shape: f32[8,32], index: 0, kind: input, shape index: {}]
  %s1 = inlined_call_operand.vmem [shape: f32[1,32], index: 1, kind: input, shape index: {}]
  %s2 = inlined_call_operand.vmem [shape: f32[1,32], index: 2, kind: input, shape index: {}]
  %s3 = inlined_call_operand.hbm [shape: f32[32,128], index: 3, kind: input, shape index: {}]
  %s4 = inlined_call_operand.vmem [shape: f32[1,128], index: 4, kind: input, shape index: {}]
  %s5 = inlined_call_operand.hbm [shape: f32[8,128], index: 5, kind: output, shape index: {}]
  %s6 = sld [smem:[#allocation0]]
  $region38: #{tpu_custom_call.1} parent=0
    _
  %s8 = ssub.s32 1, %s6
  %s9 = scalar_select 0, %s8, %s6
  $region1: #{tpu_custom_call.1} parent=0
    #allocation2 [shape = 'u8[4096]{0}', space=vmem, size = 0x1000, scoped, tag = 'input window, operand 0, single buffered']
    #allocation3 [shape = 's32[1]{0}', space=sflag, size = 0x4, scoped, tag = 'scoped memory for tpu_custom_call.1']
    #allocation4 [shape = 's32[1]{0}', space=sflag, size = 0x4, scoped, tag = 'scoped memory for tpu_custom_call.1']
    #allocation5 [shape = 'u8[16384]{0}', space=vmem, size = 0x4000, scoped, tag = 'input window, operand 3, single buffered']
    #allocation6 [shape = 's32[1]{0}', space=sflag, size = 0x4, scoped, tag = 'scoped memory for tpu_custom_call.1']
    #allocation7 [shape = 'u8[4096]{0}', space=vmem, size = 0x1000, scoped, tag = 'output window, operand 0, single buffered']
    %10 = vsyncpa [#allocation3], 0
    %11 = vsyncpa [#allocation6], 0
    %12 = vsyncpa [#allocation4], 0
    // Predicated region
    $region2: #{tpu_custom_call.1} parent=1 // pred_check
      _
    $region3: #{tpu_custom_call.1} parent=1 // pred_check_branch
      %14 = sbr.rel (0) target = $region5
    $region4: #{tpu_custom_call.1} parent=1 // pred_region
      %s16 = ssub.s32 128, 128
      %17 = vsyncadd [#allocation3], %s16
      %s19 = sshll.u32 [#allocation2], 4
      %s20 = int_to_ptr.vmem [resolvable:$true] %s19
      %22 = dma.hbm_to_vmem [thread:$0]  %s0, 128, %s20, [#allocation3]
    $region5: #{tpu_custom_call.1} parent=1 // pred_fallthru
      _
    // Predicated region
    $region6: #{tpu_custom_call.1} parent=1 // pred_check
      _
    $region7: #{tpu_custom_call.1} parent=1 // pred_check_branch
      %24 = sbr.rel (0) target = $region9
    $region8: #{tpu_custom_call.1} parent=1 // pred_region
      _
    $region9: #{tpu_custom_call.1} parent=1 // pred_fallthru
      _
    // Predicated region
    $region10: #{tpu_custom_call.1} parent=1 // pred_check
      _
    $region11: #{tpu_custom_call.1} parent=1 // pred_check_branch
      %26 = sbr.rel (0) target = $region13
    $region12: #{tpu_custom_call.1} parent=1 // pred_region
      _
    $region13: #{tpu_custom_call.1} parent=1 // pred_fallthru
      _
    // Predicated region
    $region14: #{tpu_custom_call.1} parent=1 // pred_check
      _
    $region15: #{tpu_custom_call.1} parent=1 // pred_check_branch
      %28 = sbr.rel (0) target = $region17
    $region16: #{tpu_custom_call.1} parent=1 // pred_region
      %s30 = ssub.s32 512, 512
      %31 = vsyncadd [#allocation6], %s30
      %s32 = sshll.u32 [#allocation5], 4
      %s33 = int_to_ptr.vmem [resolvable:$true] %s32
      %38 = dma.hbm_to_vmem [thread:$0]  %s3, 512, %s33, [#allocation6], 128, 128, 8
    $region17: #{tpu_custom_call.1} parent=1 // pred_fallthru
      _
    // Predicated region
    $region18: #{tpu_custom_call.1} parent=1 // pred_check
      _
    $region19: #{tpu_custom_call.1} parent=1 // pred_check_branch
      %40 = sbr.rel (0) target = $region21
    $region20: #{tpu_custom_call.1} parent=1 // pred_region
      _
    $region21: #{tpu_custom_call.1} parent=1 // pred_fallthru
      _
    // Predicated region
    $region22: #{tpu_custom_call.1} parent=1 // pred_check
      _
    $region23: #{tpu_custom_call.1} parent=1 // pred_check_branch
      %42 = sbr.rel (0) target = $region25
    $region24: #{tpu_custom_call.1} parent=1 // pred_region
      %43 = dma.done [#allocation3], 128
    $region25: #{tpu_custom_call.1} parent=1 // pred_fallthru
      _
    // Predicated region
    $region26: #{tpu_custom_call.1} parent=1 // pred_check
      _
    $region27: #{tpu_custom_call.1} parent=1 // pred_check_branch
      %45 = sbr.rel (0) target = $region29
    $region28: #{tpu_custom_call.1} parent=1 // pred_region
      %46 = dma.done [#allocation6], 512
    $region29: #{tpu_custom_call.1} parent=1 // pred_fallthru
      _
    %v47 = vld [vmem:[#allocation2] sm:$0xff]
    %v48 = vld [vmem:[%s1] sm:$0x1]
    %v50 = vlaneseq
    %v51 = vshrl.u32 %v50, 7
    %v52 = vsub.s32 0, %v51
    %v53 = vrot.slane %v48, %v52
    %v55 = vsub.f32 %v47, %v53
    %v56 = vld [vmem:[%s2] sm:$0x1]
    %v58 = vlaneseq
    %v59 = vshrl.u32 %v58, 7
    %v60 = vsub.s32 0, %v59
    %v61 = vrot.slane %v56, %v60
    %v63 = vmul.f32 %v55, %v61
    %v64 = vmax.f32 %v63, -3.0
    %v65 = vmin.f32 %v64, 3.0
    %v66 = vld [vmem:[#allocation5] sm:$0xff]
    %v67 = vld [vmem:[#allocation5 + $0x8] sm:$0xff]
    %v68 = vld [vmem:[#allocation5 + $0x10] sm:$0xff]
    %v69 = vld [vmem:[#allocation5 + $0x18] sm:$0xff]
    %v70 = vld [vmem:[%s4] sm:$0x1]
    %v72 = vlaneseq
    %v73 = vshrl.u32 %v72, 7
    %v74 = vsub.s32 0, %v73
    %v75 = vrot.slane %v70, %v74
    %vm77 = vcmask 261120
    %v79 = vsel %vm77, %v65, 0
    %81 = vmatprep.subr.mxu0 0.0
    %82 = vmatpush1.msra.mxu0 %v66
    %83 = vmatprep.subr.mxu0 0.0
    %84 = vmatpush1.msra.mxu0 %v67
    %85 = vmatprep.subr.mxu0 0.0
    %86 = vmatpush1.msra.mxu0 %v68
    %87 = vmatprep.subr.mxu0 0.0
    %88 = vmatpush1.msra.mxu0 %v69
    %89 = vmatprep.subr.mxu0 0.0
    %90 = vmatpush1.msra.mxu0 0.0
    %91 = vmatprep.subr.mxu0 0.0
    %92 = vmatpush1.msra.mxu0 0.0
    %93 = vmatprep.subr.mxu0 0.0
    %94 = vmatpush1.msra.mxu0 0.0
    %95 = vmatprep.subr.mxu0 0.0
    %96 = vmatpush1.msra.mxu0 0.0
    %97 = vmatprep.subr.mxu0 0.0
    %98 = vmatpush1.msra.mxu0 0.0
    %99 = vmatprep.subr.mxu0 0.0
    %100 = vmatpush1.msra.mxu0 0.0
    %101 = vmatprep.subr.mxu0 0.0
    %102 = vmatpush1.msra.mxu0 0.0
    %103 = vmatprep.subr.mxu0 0.0
    %104 = vmatpush1.msra.mxu0 0.0
    %105 = vmatprep.subr.mxu0 0.0
    %106 = vmatpush1.msra.mxu0 0.0
    %107 = vmatprep.subr.mxu0 0.0
    %108 = vmatpush1.msra.mxu0 0.0
    %109 = vmatprep.subr.mxu0 0.0
    %110 = vmatpush1.msra.mxu0 0.0
    %111 = vmatprep.subr.mxu0 0.0
    %112 = vmatpush1.msra.mxu0 0.0
    %113 = vmatprep.subr.mxu0 0.0
    %114 = vmatpush1.msra.mxu0 0.0
    %115 = vmatprep.subr.mxu0 0.0
    %116 = vmatpush1.msra.mxu0 0.0
    %117 = vmatprep.subr.mxu0 0.0
    %118 = vmatpush1.msra.mxu0 0.0
    %119 = vmatprep.subr.mxu0 0.0
    %120 = vmatpush1.msra.mxu0 0.0
    %121 = vmatprep.subr.mxu0 0.0
    %122 = vmatpush1.msra.mxu0 0.0
    %123 = vmatprep.subr.mxu0 0.0
    %124 = vmatpush1.msra.mxu0 0.0
    %125 = vmatprep.subr.mxu0 0.0
    %126 = vmatpush1.msra.mxu0 0.0
    %127 = vmatprep.subr.mxu0 0.0
    %128 = vmatpush1.msra.mxu0 0.0
    %129 = vmatprep.subr.mxu0 0.0
    %130 = vmatpush1.msra.mxu0 0.0
    %131 = vmatprep.subr.mxu0 0.0
    %132 = vmatpush1.msra.mxu0 0.0
    %133 = vmatprep.subr.mxu0 0.0
    %134 = vmatpush1.msra.mxu0 0.0
    %135 = vmatprep.subr.mxu0 0.0
    %136 = vmatpush1.msra.mxu0 0.0
    %137 = vmatprep.subr.mxu0 0.0
    %138 = vmatpush1.msra.mxu0 0.0
    %139 = vmatprep.subr.mxu0 0.0
    %140 = vmatpush1.msra.mxu0 0.0
    %141 = vmatprep.subr.mxu0 0.0
    %142 = vmatpush1.msra.mxu0 0.0
    %143 = vmatprep.subr.mxu0 0.0
    %144 = vmatpush1.msra.mxu0 0.0
    %145 = vmatprep.mubr.f32.mxu0 0.0
    %146 = vmatmul.mubr.f32.gmra.mrb[0].mxu0 %v79
    %v147 = vpop.f32.mrb[0].mxu0
    %v148 = vadd.f32 %v75, %v147
    %v149 = vpop.f32.mrb[0].mxu0
    %150 = vdwg.mxu0
    %151 = vst [vmem:[#allocation7] sm:$0xff] %v148
    // Predicated region
    $region30: #{tpu_custom_call.1} parent=1 // pred_check
      _
    $region31: #{tpu_custom_call.1} parent=1 // pred_check_branch
      %153 = sbr.rel (0) target = $region33
    $region32: #{tpu_custom_call.1} parent=1 // pred_region
      %s155 = ssub.s32 128, 128
      %156 = vsyncadd [#allocation4], %s155
      %s158 = sshll.u32 [#allocation7], 4
      %s159 = int_to_ptr.vmem [resolvable:$true] %s158
      %161 = dma.vmem_to_hbm [thread:$0]  %s159, 128, %s5, [#allocation4]
    $region33: #{tpu_custom_call.1} parent=1 // pred_fallthru
      _
    // Predicated region
    $region34: #{tpu_custom_call.1} parent=1 // pred_check
      _
    $region35: #{tpu_custom_call.1} parent=1 // pred_check_branch
      %163 = sbr.rel (0) target = $region37
    $region36: #{tpu_custom_call.1} parent=1 // pred_region
      %164 = dma.done [#allocation4], 128
    $region37: #{tpu_custom_call.1} parent=1 // pred_fallthru
      _
    %165 = vsyncpa [#allocation3], 1
    %166 = vsyncpa [#allocation6], 1
    %167 = vsyncpa [#allocation4], 1

</llo_original>
